<compile_context>
chip_gen: v5e
topology: v5e:2x2
jax: 0.10.0
libtpu: 0.0.40
codegen_flags: <defaults>
</compile_context>

<pallas_src>
import jax
import jax.numpy as jnp
from jax.experimental import pallas as pl
from jax.experimental.pallas import tpu as pltpu


def _normalize_kernel(x_ref, m_ref, s_ref, o_ref):
    # x_ref: (tr, ts) tile; m_ref: (tr, 1) mean in x.dtype; s_ref: (tr, 1) f32
    # reciprocal std.  Pure VPU elementwise; the f32 multiply promotes, then we
    # cast back to the output dtype.
    centered = x_ref[...] - m_ref[...]
    o_ref[...] = (centered * s_ref[...]).astype(o_ref.dtype)


def _choose_tiles(R, S_pad, itemsize):
    """Pick (tr, ts): ~4 MiB per (tr, ts) block, tr mult-of-8 (or full R),
    ts mult-of-128 (or full S_pad). Never exceeds the budget even for huge S."""
    block_budget = 4 * 1024 * 1024  # bytes per x/out block

    # Lane tile: sized so even a minimum 8-row tile stays within budget.
    ts_cap = max(128, (block_budget // (8 * itemsize)) // 128 * 128)
    ts = S_pad if S_pad <= ts_cap else ts_cap  # full extent or multiple of 128

    # Row tile: fill the budget at this ts.
    tr_cap = max(8, (block_budget // (ts * itemsize)) // 8 * 8)
    tr = R if R <= tr_cap else tr_cap  # full extent or multiple of 8
    return tr, ts


def _vmem_bytes_estimate(tr, ts, x_itemsize):
    # x-in + out, double-buffered.
    xout = 2 * 2 * tr * ts * x_itemsize
    # mean (x.dtype) + inv_std (f32): (tr, 1) blocks are lane-padded to
    # (tr, 128) words in VMEM, double-buffered.
    consts = 2 * tr * 128 * x_itemsize + 2 * tr * 128 * 4
    return xout + consts


def normalize(x, mean, std):
    """x: (B, C, H, W), mean/std: (C,) -> (x - mean) / std, NCHW."""
    B, C, H, W = x.shape
    R = B * C
    S = H * W

    x_flat = x.reshape(R, S)

    # Guarantee a lane-dense last dim (multiple of 128) so the output never
    # needs masked partial stores.  Only pads when H*W % 128 != 0.
    S_pad = -(-S // 128) * 128
    if S_pad != S:
        x_flat = jnp.pad(x_flat, ((0, 0), (0, S_pad - S)))

    # Per-row (batch*channel) constants; fold the division into a multiply.
    # inv_std stays f32 inside the kernel (precision for bf16 inputs).
    mean_r = jnp.tile(mean.astype(x.dtype), B).reshape(R, 1)
    inv_std_r = jnp.tile(1.0 / std.astype(jnp.float32), B).reshape(R, 1)

    tr, ts = _choose_tiles(R, S_pad, x.dtype.itemsize)
    grid = (pl.cdiv(R, tr), pl.cdiv(S_pad, ts))

    vmem_needed = _vmem_bytes_estimate(tr, ts, x.dtype.itemsize)
    vmem_limit = int(min(48 * 1024 * 1024,
                         max(16 * 1024 * 1024, vmem_needed + 4 * 1024 * 1024)))

    out_flat = pl.pallas_call(
        _normalize_kernel,
        out_shape=jax.ShapeDtypeStruct((R, S_pad), x.dtype),
        grid_spec=pltpu.PrefetchScalarGridSpec(
            num_scalar_prefetch=0,
            grid=grid,
            in_specs=[
                pl.BlockSpec((tr, ts), lambda i, j: (i, j)),
                # Constants depend only on the row tile `i`; since `j` is the
                # innermost grid axis, Pallas keeps these blocks resident and
                # skips the re-DMA while `i` is unchanged.
                pl.BlockSpec((tr, 1), lambda i, j: (i, 0)),
                pl.BlockSpec((tr, 1), lambda i, j: (i, 0)),
            ],
            out_specs=pl.BlockSpec((tr, ts), lambda i, j: (i, j)),
        ),
        compiler_params=pltpu.CompilerParams(
            dimension_semantics=("parallel", "parallel"),
            vmem_limit_bytes=vmem_limit,
        ),
    )(x_flat, mean_r, inv_std_r)

    if S_pad != S:
        out_flat = out_flat[:, :S]
    return out_flat.reshape(B, C, H, W)


if __name__ == "__main__":
    key = jax.random.PRNGKey(0)
    B, C, H, W = 2, 3, 16, 16

    # ImageNet stats (the module's defaults).
    imagenet_mean = jnp.array([0.485, 0.456, 0.406], dtype=jnp.float32)
    imagenet_std = jnp.array([0.229, 0.224, 0.225], dtype=jnp.float32)

    x = jax.random.normal(key, (B, C, H, W), dtype=jnp.float32)

    out = normalize(x, imagenet_mean, imagenet_std)
    jax.block_until_ready(out)

    # Reference (plain JAX), mirroring the PyTorch forward.
    ref = (x - imagenet_mean[None, :, None, None]) / imagenet_std[None, :, None, None]

    assert out.shape == (B, C, H, W)
    assert jnp.allclose(out, ref, atol=1e-5, rtol=1e-5)

    print("KERNEL_OK")
</pallas_src>

<mosaic_0001>
module attributes {stable_mosaic.version = 11 : i64} {
  func.func @_normalize_kernel(%arg0: i32, %arg1: i32, %arg2: memref<6x256xf32, #tpu.memory_space<vmem>>, %arg3: memref<6x1xf32, #tpu.memory_space<vmem>>, %arg4: memref<6x1xf32, #tpu.memory_space<vmem>>, %arg5: memref<6x256xf32, #tpu.memory_space<vmem>>) attributes {dimension_semantics = [#tpu.dimension_semantics<parallel>, #tpu.dimension_semantics<parallel>], iteration_bounds = array<i64: 1, 1>, scalar_prefetch = 0 : i64, scratch_operands = 0 : i64, tpu.core_type = #tpu.core_type<tc>, window_params = [{transform_indices = @transform_0, window_bounds = array<i64: 6, 256>}, {transform_indices = @transform_1, window_bounds = array<i64: 6, 1>}, {transform_indices = @transform_2, window_bounds = array<i64: 6, 1>}, {transform_indices = @transform_3, window_bounds = array<i64: 6, 256>}]} {
    %c0 = arith.constant 0 : index
    %c0_0 = arith.constant 0 : index
    %0 = vector.load %arg2[%c0, %c0_0] : memref<6x256xf32, #tpu.memory_space<vmem>>, vector<6x256xf32>
    %c0_1 = arith.constant 0 : index
    %c0_2 = arith.constant 0 : index
    %1 = vector.load %arg3[%c0_1, %c0_2] : memref<6x1xf32, #tpu.memory_space<vmem>>, vector<6x1xf32>
    %2 = vector.broadcast %1 : vector<6x1xf32> to vector<6x256xf32>
    %3 = arith.subf %0, %2 : vector<6x256xf32>
    %c0_3 = arith.constant 0 : index
    %c0_4 = arith.constant 0 : index
    %4 = vector.load %arg4[%c0_3, %c0_4] : memref<6x1xf32, #tpu.memory_space<vmem>>, vector<6x1xf32>
    %5 = vector.broadcast %4 : vector<6x1xf32> to vector<6x256xf32>
    %6 = arith.mulf %3, %5 : vector<6x256xf32>
    %c0_5 = arith.constant 0 : index
    %c0_6 = arith.constant 0 : index
    %7 = vector.load %arg5[%c0_5, %c0_6] : memref<6x256xf32, #tpu.memory_space<vmem>>, vector<6x256xf32>
    tpu.vector_store %arg5[%c0_5, %c0_6], %6 {strides = array<i32>} : memref<6x256xf32, #tpu.memory_space<vmem>>, vector<6x256xf32>,
    return
  }
  func.func @transform_0(%arg0: i32, %arg1: i32) -> (i32, i32) {
    %c0_i32 = arith.constant 0 : i32
    return %arg0, %arg1 : i32, i32
  }
  func.func @transform_1(%arg0: i32, %arg1: i32) -> (i32, i32) {
    %c0_i32 = arith.constant 0 : i32
    %c0_i32_0 = arith.constant 0 : i32
    return %arg0, %c0_i32 : i32, i32
  }
  func.func @transform_2(%arg0: i32, %arg1: i32) -> (i32, i32) {
    %c0_i32 = arith.constant 0 : i32
    %c0_i32_0 = arith.constant 0 : i32
    return %arg0, %c0_i32 : i32, i32
  }
  func.func @transform_3(%arg0: i32, %arg1: i32) -> (i32, i32) {
    %c0_i32 = arith.constant 0 : i32
    return %arg0, %arg1 : i32, i32
  }
}

</mosaic_0001>

<llo_original>
// kernel: tpu_custom_call.1
$region0: #{tpu_custom_call.1}
  #allocation0 [shape = 'u32[]', space=smem, size = 0x4, offset = 0x4, fixed_abs, tag = 'smem constant byte address 0x4 - core index']
  #allocation1 [shape = 'u32[72,128]{1,0:T(1,128)}', space=vmem, size = 0x9000, scoped, tag = 'internal scratch']
  %s0 = inlined_call_operand.vmem [shape: f32[6,256], index: 0, kind: input, shape index: {}]
  %s1 = inlined_call_operand.vmem [shape: f32[6,1], index: 1, kind: input, shape index: {}]
  %s2 = inlined_call_operand.vmem [shape: f32[6,1], index: 2, kind: input, shape index: {}]
  %s3 = inlined_call_operand.hbm [shape: f32[6,256], index: 3, kind: output, shape index: {}]
  %s4 = sld [smem:[#allocation0]]
  $region22: #{tpu_custom_call.1} parent=0
    _
  %s6 = ssub.s32 1, %s4
  %s7 = scalar_select 0, %s6, %s4
  $region1: #{tpu_custom_call.1} parent=0
    #allocation2 [shape = 'u8[8192]{0}', space=vmem, size = 0x2000, scoped, tag = 'output window, operand 0, single buffered']
    #allocation3 [shape = 's32[1]{0}', space=sflag, size = 0x4, scoped, tag = 'scoped memory for tpu_custom_call.1']
    %8 = vsyncpa [#allocation3], 0
    // Predicated region
    $region2: #{tpu_custom_call.1} parent=1 // pred_check
      _
    $region3: #{tpu_custom_call.1} parent=1 // pred_check_branch
      %10 = sbr.rel (0) target = $region5
    $region4: #{tpu_custom_call.1} parent=1 // pred_region
      _
    $region5: #{tpu_custom_call.1} parent=1 // pred_fallthru
      _
    // Predicated region
    $region6: #{tpu_custom_call.1} parent=1 // pred_check
      _
    $region7: #{tpu_custom_call.1} parent=1 // pred_check_branch
      %12 = sbr.rel (0) target = $region9
    $region8: #{tpu_custom_call.1} parent=1 // pred_region
      _
    $region9: #{tpu_custom_call.1} parent=1 // pred_fallthru
      _
    // Predicated region
    $region10: #{tpu_custom_call.1} parent=1 // pred_check
      _
    $region11: #{tpu_custom_call.1} parent=1 // pred_check_branch
      %14 = sbr.rel (0) target = $region13
    $region12: #{tpu_custom_call.1} parent=1 // pred_region
      _
    $region13: #{tpu_custom_call.1} parent=1 // pred_fallthru
      _
    %v15 = vld [vmem:[%s0] sm:$0x3f]
    %v16 = vld [vmem:[%s0 + $0x8] sm:$0x3f]
    %v17 = vld [vmem:[%s1] sm:$0x3f]
    %19 = vset.pattern.permute.xlu0 0
    %20 = vperm.xlu0 %19, %v17
    %v21 = vpop.permute.xlu0 %20
    %v23 = vsub.f32 %v15, %v21
    %v24 = vsub.f32 %v16, %v21
    %v25 = vld [vmem:[%s2] sm:$0x3f]
    %27 = vset.pattern.permute.xlu0 0
    %28 = vperm.xlu0 %27, %v25
    %v29 = vpop.permute.xlu0 %28
    %v31 = vmul.f32 %v23, %v29
    %v32 = vmul.f32 %v24, %v29
    %33 = vst [vmem:[#allocation2] sm:$0x3f] %v31
    %34 = vst [vmem:[#allocation2 + $0x8] sm:$0x3f] %v32
    // Predicated region
    $region14: #{tpu_custom_call.1} parent=1 // pred_check
      _
    $region15: #{tpu_custom_call.1} parent=1 // pred_check_branch
      %36 = sbr.rel (0) target = $region17
    $region16: #{tpu_custom_call.1} parent=1 // pred_region
      %38 = vsyncadd [#allocation3], 0
      %s40 = sshll.u32 [#allocation2], 4
      %s41 = int_to_ptr.vmem [resolvable:$true] %s40
      %s42 = sshll.u32 %s3, 4
      %s43 = int_to_ptr.hbm [resolvable:$true] %s42
      %45 = dma.vmem_to_hbm [thread:$0]  %s41, 256, %s43, [#allocation3]
    $region17: #{tpu_custom_call.1} parent=1 // pred_fallthru
      _
    // Predicated region
    $region18: #{tpu_custom_call.1} parent=1 // pred_check
      _
    $region19: #{tpu_custom_call.1} parent=1 // pred_check_branch
      %47 = sbr.rel (0) target = $region21
    $region20: #{tpu_custom_call.1} parent=1 // pred_region
      %49 = dma.done [#allocation3], 256
    $region21: #{tpu_custom_call.1} parent=1 // pred_fallthru
      _
    %50 = vsyncpa [#allocation3], 1

</llo_original>
